<compile_context>
chip_gen: v6e
topology: v6e:2x2x1
jax: 0.10.0
libtpu: 0.0.40
codegen_flags: <defaults>
</compile_context>

<pallas_src>
import math
import functools
import numpy as np

import jax
import jax.numpy as jnp
from jax.experimental import pallas as pl
from jax.experimental.pallas import tpu as pltpu


# ----------------------------- PE table (buffer) -----------------------------

def _positional_encoding_table(d_model, max_seq_len=80):
    """Exact same (non-standard) formula as the PyTorch reference:
         pe[pos, i]   = sin(pos / 10000 ** (2*i     / d_model))
         pe[pos, i+1] = cos(pos / 10000 ** (2*(i+1) / d_model))
    Computed in float64 then cast to float32 (mirrors Python-float math)."""
    pos = np.arange(max_seq_len, dtype=np.float64)[:, None]          # (L, 1)
    i = np.arange(0, d_model, 2, dtype=np.float64)[None, :]          # (1, D/2)
    pe = np.zeros((max_seq_len, d_model), dtype=np.float64)
    pe[:, 0::2] = np.sin(pos / 10000.0 ** (2.0 * i / d_model))
    pe[:, 1::2] = np.cos(pos / 10000.0 ** (2.0 * (i + 1.0) / d_model))
    return jnp.asarray(pe, dtype=jnp.float32)                         # (L, D)


# ------------------------------- Pallas kernel --------------------------------

def _pos_enc_kernel(x_ref, pe_ref, o_ref, *, scale):
    # x_ref : (TB, S, D) activation tile (I/O dtype; upcast for the math)
    # pe_ref: (S, D) PE rows; same block index every grid step -> VMEM-resident,
    #         broadcast over the batch tile on the VPU (never in HBM).
    x = x_ref[...].astype(jnp.float32)
    pe = pe_ref[...]
    o_ref[...] = (x * scale + pe[None, :, :]).astype(o_ref.dtype)


def _pick_batch_tile(B, slab_bytes, max_tile_bytes):
    """Largest batch tile with tile_bytes <= max_tile_bytes that divides B and
    leaves >= 2 grid steps when B >= 2 (so the "parallel" axis can shard across
    both TensorCores on v7x)."""
    tb = max(1, min(B, max_tile_bytes // max(slab_bytes, 1)))
    if B >= 2:
        tb = min(tb, (B + 1) // 2)
    while B % tb:
        tb -= 1
    return tb


def positional_encoder(x, pe, d_model, *, max_tile_bytes=4 * 1024 * 1024):
    """x: (B, S, D); pe: (max_seq_len, D) float32 constant buffer."""
    B, S, D = x.shape
    L = pe.shape[0]
    if S > L:
        raise ValueError(f"seq_len {S} exceeds max_seq_len {L}")
    scale = math.sqrt(d_model)

    # PE rows selected by BlockSpec (block (S, D) at block index (0, 0)); that
    # needs S to be a sublane multiple or the full table.  Otherwise do a
    # one-time slice of the constant buffer (no per-step relayout of x).
    pe_in = pe if (S % 8 == 0 or S == L) else jax.lax.slice(pe, (0, 0), (S, D))

    # Tile over the batch axis; the (S, D) slab of each batch element stays
    # intact, so last-two-dim blocks equal the full array dims (always legal).
    itemsize = jnp.dtype(x.dtype).itemsize
    slab_bytes = S * D * itemsize                 # one batch element
    tb = _pick_batch_tile(B, slab_bytes, max_tile_bytes)
    grid = (B // tb,)
    tile_bytes = tb * slab_bytes

    # Explicit VMEM budget: in + out double-buffered (~4x tile) + PE + slack,
    # capped so v7x's 64 MiB VMEM (32 MiB scoped default) is never exceeded.
    vmem_limit = int(min(32 * 1024 * 1024,
                         max(4 * 1024 * 1024,
                             4 * tile_bytes + 2 * S * D * 4 + (1 << 20))))

    kern = functools.partial(_pos_enc_kernel, scale=scale)
    return pl.pallas_call(
        kern,
        out_shape=jax.ShapeDtypeStruct((B, S, D), x.dtype),
        grid=grid,
        in_specs=[
            pl.BlockSpec((tb, S, D), lambda b: (b, 0, 0)),    # activations
            pl.BlockSpec((S, D), lambda b: (0, 0)),           # PE rows, resident
        ],
        out_specs=pl.BlockSpec((tb, S, D), lambda b: (b, 0, 0)),
        input_output_aliases={0: 0},                          # reuse x's buffer
        compiler_params=pltpu.CompilerParams(
            dimension_semantics=("parallel",),                # v7x megacore
            vmem_limit_bytes=vmem_limit,
        ),
    )(x, pe_in)


# ---------------------------------- main --------------------------------------

if __name__ == "__main__":
    d_model, max_seq_len = 32, 80
    B, S = 2, 8

    key = jax.random.PRNGKey(0)
    x = jax.random.normal(key, (B, S, d_model), jnp.float32)
    pe = _positional_encoding_table(d_model, max_seq_len)

    # Pure-numpy reference (same semantics as the PyTorch forward), computed
    # BEFORE the call since x's buffer is aliased into the output.
    x_np = np.asarray(x)
    pe_np = np.asarray(pe)
    ref = x_np * np.float32(math.sqrt(d_model)) + pe_np[:S][None, :, :]

    out = positional_encoder(x, pe, d_model)
    out = jax.block_until_ready(out)

    assert out.shape == (B, S, d_model)
    assert bool(jnp.all(jnp.isfinite(out)))
    np.testing.assert_allclose(np.asarray(out), ref, rtol=1e-6, atol=1e-6)
    print("KERNEL_OK")
</pallas_src>

<mosaic_0001>
module attributes {stable_mosaic.version = 11 : i64} {
  func.func @_pos_enc_kernel(%arg0: i32, %arg1: memref<1x8x32xf32, #tpu.memory_space<vmem>>, %arg2: memref<8x32xf32, #tpu.memory_space<vmem>>, %arg3: memref<1x8x32xf32, #tpu.memory_space<vmem>>) attributes {dimension_semantics = [#tpu.dimension_semantics<parallel>], iteration_bounds = array<i64: 2>, scalar_prefetch = 0 : i64, scratch_operands = 0 : i64, tpu.core_type = #tpu.core_type<tc>, window_params = [{transform_indices = @transform_0, window_bounds = array<i64: 1, 8, 32>}, {transform_indices = @transform_1, window_bounds = array<i64: 8, 32>}, {transform_indices = @transform_2, window_bounds = array<i64: 1, 8, 32>}]} {
    %c0 = arith.constant 0 : index
    %c0_0 = arith.constant 0 : index
    %c0_1 = arith.constant 0 : index
    %0 = vector.load %arg1[%c0, %c0_0, %c0_1] : memref<1x8x32xf32, #tpu.memory_space<vmem>>, vector<1x8x32xf32>
    %c0_2 = arith.constant 0 : index
    %c0_3 = arith.constant 0 : index
    %1 = vector.load %arg2[%c0_2, %c0_3] : memref<8x32xf32, #tpu.memory_space<vmem>>, vector<8x32xf32>
    %cst = arith.constant 5.65685415 : f32
    %2 = vector.broadcast %cst : f32 to vector<1x8x32xf32>
    %3 = arith.mulf %0, %2 : vector<1x8x32xf32>
    %4 = vector.shape_cast %1 : vector<8x32xf32> to vector<1x8x32xf32>
    %5 = arith.addf %3, %4 : vector<1x8x32xf32>
    %c0_4 = arith.constant 0 : index
    %c0_5 = arith.constant 0 : index
    %c0_6 = arith.constant 0 : index
    %6 = vector.load %arg3[%c0_4, %c0_5, %c0_6] : memref<1x8x32xf32, #tpu.memory_space<vmem>>, vector<1x8x32xf32>
    tpu.vector_store %arg3[%c0_4, %c0_5, %c0_6], %5 {strides = array<i32>} : memref<1x8x32xf32, #tpu.memory_space<vmem>>, vector<1x8x32xf32>,
    return
  }
  func.func @transform_0(%arg0: i32) -> (i32, i32, i32) {
    %c0_i32 = arith.constant 0 : i32
    %c0_i32_0 = arith.constant 0 : i32
    %c0_i32_1 = arith.constant 0 : i32
    return %arg0, %c0_i32, %c0_i32_0 : i32, i32, i32
  }
  func.func @transform_1(%arg0: i32) -> (i32, i32) {
    %c0_i32 = arith.constant 0 : i32
    %c0_i32_0 = arith.constant 0 : i32
    %c0_i32_1 = arith.constant 0 : i32
    return %c0_i32, %c0_i32_0 : i32, i32
  }
  func.func @transform_2(%arg0: i32) -> (i32, i32, i32) {
    %c0_i32 = arith.constant 0 : i32
    %c0_i32_0 = arith.constant 0 : i32
    %c0_i32_1 = arith.constant 0 : i32
    return %arg0, %c0_i32, %c0_i32_0 : i32, i32, i32
  }
}

</mosaic_0001>

<llo_original>
// kernel: tpu_custom_call.1
$region0: #{tpu_custom_call.1}
  #allocation0 [shape = 'u32[]', space=smem, size = 0x4, offset = 0x4, fixed_abs, tag = 'smem constant byte address 0x4 - core index']
  #allocation1 [shape = 'u32[144,128]{1,0:T(1,128)}', space=vmem, size = 0x12000, scoped, tag = 'internal scratch']
  %s0 = inlined_call_operand.hbm [shape: f32[2,8,32], index: 0, kind: input, shape index: {}, may-alias: {0,2}]
  %s1 = inlined_call_operand.vmem [shape: f32[80,32], index: 1, kind: input, shape index: {}]
  %s2 = inlined_call_operand.hbm [shape: f32[2,8,32], index: 2, kind: output, shape index: {}, may-alias: {0,2}]
  %s3 = sld [smem:[#allocation0]]
  $region45: #{tpu_custom_call.1} parent=0
    _
  %s5 = ssub.s32 1, %s3
  %s6 = scalar_select 0, %s5, %s3
  $region1: #{tpu_custom_call.1} parent=0
    #allocation2 [shape = 'u8[8192]{0}', space=vmem, size = 0x2000, scoped, tag = 'input window, operand 0']
    #allocation3 [shape = 's32[2]{0}', space=sflag, size = 0x8, scoped, tag = 'scoped memory for tpu_custom_call.1']
    #allocation4 [shape = 's32[2]{0}', space=sflag, size = 0x8, scoped, tag = 'scoped memory for tpu_custom_call.1']
    #allocation5 [shape = 'u8[8192]{0}', space=vmem, size = 0x2000, scoped, tag = 'output window, operand 0']
    %7 = vsyncpa [#allocation3], 0
    %s8 = scalar_lea.sflag [#allocation3], 1
    %9 = vsyncpa %s8, 0
    %10 = vsyncpa [#allocation4], 0
    %s11 = scalar_lea.sflag [#allocation4], 1
    %12 = vsyncpa %s11, 0
    loop: start=0, step=1, limit=4
    $region2: #{tpu_custom_call.1} parent=1 // loop_pre_header
      _
    $region3: #{tpu_custom_call.1} parent=1 // loop_header
      %s14 = sphi 0, %s18
      %p15 = scmp.ge.s32.totalorder %s14, 4
      %s24 = sphi 0, %s26
      %s27 = sphi 0, %s24
      %s28 = sphi 0, %s27
      %s44 = sphi 0, %s28
      %s48 = sphi 0, %s48
      %s50 = sphi 0, %s48
      %s51 = sphi 0, %s50
      %s65 = sphi 0, %s51
      %s71 = sphi 0, %s73
      %s74 = sphi 0, %s71
      %s75 = sphi 0, %s74
      %s91 = sphi 0, %s75
    $region4: #{tpu_custom_call.1} parent=1 // loop_header_branch
      %17 = sbr.rel (%p15) target = $region8
    $region5: #{tpu_custom_call.1} parent=1 // loop_body
      %s19 = ssub.s32 %s14, 1
      %s20 = ssub.s32 %s14, 2
      %s21 = sadd.s32 %s14, 1
      %s22 = ssub.s32 %s14, %s21
      %p23 = scmp.eq.s32.totalorder %s22, 0
      %s25 = sadd.s32 %s24, 1
      %s26 = scalar_select %p23, %s24, %s25
      %p29 = pneg %p23
      %p30 = scmp.eq.s32.totalorder %s14, 1
      %p31 = por %p29, %p30
      %p32 = scmp.ne.s32.totalorder %s24, %s27
      %p33 = scmp.eq.s32.totalorder %s14, 0
      %p34 = por %p32, %p33
      %p35 = scmp.ne.s32.totalorder %s24, %s27
      %p36 = scmp.eq.s32.totalorder %s19, 1
      %p37 = por %p35, %p36
      %p38 = scmp.ne.s32.totalorder %s27, %s28
      %p39 = scmp.eq.s32.totalorder %s19, 0
      %p40 = por %p38, %p39
      %p41 = scmp.ne.s32.totalorder %s27, %s28
      %p42 = scmp.eq.s32.totalorder %s20, 1
      %p43 = por %p41, %p42
      %p45 = scmp.ne.s32.totalorder %s28, %s44
      %p46 = scmp.eq.s32.totalorder %s20, 0
      %p47 = por %p45, %p46
      %s49 = sadd.s32 %s48, 1
      %p52 = scmp.eq.s32.totalorder %s14, 1
      %p53 = scmp.ne.s32.totalorder %s48, %s50
      %p54 = scmp.eq.s32.totalorder %s14, 0
      %p55 = por %p53, %p54
      %p56 = scmp.ne.s32.totalorder %s48, %s50
      %p57 = scmp.eq.s32.totalorder %s19, 1
      %p58 = por %p56, %p57
      %p59 = scmp.ne.s32.totalorder %s50, %s51
      %p60 = scmp.eq.s32.totalorder %s19, 0
      %p61 = por %p59, %p60
      %p62 = scmp.ne.s32.totalorder %s50, %s51
      %p63 = scmp.eq.s32.totalorder %s20, 1
      %p64 = por %p62, %p63
      %p66 = scmp.ne.s32.totalorder %s51, %s65
      %p67 = scmp.eq.s32.totalorder %s20, 0
      %p68 = por %p66, %p67
      %s69 = ssub.s32 %s14, %s21
      %p70 = scmp.eq.s32.totalorder %s69, 0
      %s72 = sadd.s32 %s71, 1
      %s73 = scalar_select %p70, %s71, %s72
      %p76 = pneg %p70
      %p77 = scmp.eq.s32.totalorder %s14, 1
      %p78 = por %p76, %p77
      %p79 = scmp.ne.s32.totalorder %s71, %s74
      %p80 = scmp.eq.s32.totalorder %s14, 0
      %p81 = por %p79, %p80
      %p82 = scmp.ne.s32.totalorder %s71, %s74
      %p83 = scmp.eq.s32.totalorder %s19, 1
      %p84 = por %p82, %p83
      %p85 = scmp.ne.s32.totalorder %s74, %s75
      %p86 = scmp.eq.s32.totalorder %s19, 0
      %p87 = por %p85, %p86
      %p88 = scmp.ne.s32.totalorder %s74, %s75
      %p89 = scmp.eq.s32.totalorder %s20, 1
      %p90 = por %p88, %p89
      %p92 = scmp.ne.s32.totalorder %s75, %s91
      %p93 = scmp.eq.s32.totalorder %s20, 0
      %p94 = por %p92, %p93
      %p95 = scmp.le.s32.totalorder 1, %s14
      %p96 = scmp.lt.s32.totalorder %s14, 3
      %p97 = pnand %p95, %p96
      %p98 = pneg %p97
      // Predicated region
      $region9: #{tpu_custom_call.1} parent=5 // pred_check
        _
      $region10: #{tpu_custom_call.1} parent=5 // pred_check_branch
        %100 = sbr.rel (%p97) target = $region12
      $region11: #{tpu_custom_call.1} parent=5 // pred_region
        %s101 = ssub.s32 %s14, 1
        // Predicated region
        $region13: #{tpu_custom_call.1} parent=11 // pred_check
          %p102 = pneg %p61
        $region14: #{tpu_custom_call.1} parent=11 // pred_check_branch
          %104 = sbr.rel (%p102) target = $region16
        $region15: #{tpu_custom_call.1} parent=11 // pred_region
          _
        $region16: #{tpu_custom_call.1} parent=11 // pred_fallthru
          _
      $region12: #{tpu_custom_call.1} parent=5 // pred_fallthru
        _
      %p105 = scmp.lt.s32.totalorder %s14, 2
      // Predicated region
      $region17: #{tpu_custom_call.1} parent=5 // pred_check
        %p106 = pneg %p105
      $region18: #{tpu_custom_call.1} parent=5 // pred_check_branch
        %108 = sbr.rel (%p106) target = $region20
      $region19: #{tpu_custom_call.1} parent=5 // pred_region
        // Predicated region
        $region21: #{tpu_custom_call.1} parent=19 // pred_check
          %p109 = pneg %p34
        $region22: #{tpu_custom_call.1} parent=19 // pred_check_branch
          %111 = sbr.rel (%p109) target = $region24
        $region23: #{tpu_custom_call.1} parent=19 // pred_region
          %s112 = sand.u32 %s24, 1
          %s113 = scalar_lea.sflag [#allocation3], %s112
          %s114 = sand.u32 %s24, 1
          %s115 = smul.addr %s114, 8
          %s116 = scalar_lea.vmem [#allocation2], %s115
          %s118 = ssub.s32 128, 128
          %119 = vsyncadd %s113, %s118
          %s120 = smul.addr %s14, 128
          %s121 = scalar_lea.hbm %s0, %s120
          %s123 = sshll.u32 %s116, 4
          %s124 = int_to_ptr.vmem [resolvable:$true] %s123
          %126 = dma.hbm_to_vmem [thread:$0]  %s121, 128, %s124, %s113
        $region24: #{tpu_custom_call.1} parent=19 // pred_fallthru
          _
      $region20: #{tpu_custom_call.1} parent=5 // pred_fallthru
        _
      %p127 = scmp.le.s32.totalorder 1, %s14
      %p128 = scmp.lt.s32.totalorder %s14, 3
      %p129 = pnand %p127, %p128
      %p130 = pneg %p129
      // Predicated region
      $region25: #{tpu_custom_call.1} parent=5 // pred_check
        _
      $region26: #{tpu_custom_call.1} parent=5 // pred_check_branch
        %132 = sbr.rel (%p129) target = $region28
      $region27: #{tpu_custom_call.1} parent=5 // pred_region
        %s133 = ssub.s32 %s14, 1
        %s134 = sand.u32 %s27, 1
        %s135 = scalar_lea.sflag [#allocation3], %s134
        %s136 = sand.u32 %s27, 1
        %s137 = smul.addr %s136, 8
        %s138 = scalar_lea.vmem [#allocation2], %s137
        // Predicated region
        $region29: #{tpu_custom_call.1} parent=27 // pred_check
          %p139 = pneg %p40
        $region30: #{tpu_custom_call.1} parent=27 // pred_check_branch
          %141 = sbr.rel (%p139) target = $region32
        $region31: #{tpu_custom_call.1} parent=27 // pred_region
          %142 = dma.done %s135, 128
        $region32: #{tpu_custom_call.1} parent=27 // pred_fallthru
          _
        %s143 = sand.u32 %s27, 1
        %s144 = scalar_lea.sflag [#allocation3], %s143
        %s145 = sand.u32 %s27, 1
        %s146 = smul.addr %s145, 8
        %s147 = scalar_lea.vmem [#allocation2], %s146
        %p148 = pneg %p40
        %p149 = pneg %p37
        %p150 = pneg %p61
        %p151 = pneg %p58
        %p152 = pneg %p87
        %p153 = pneg %p84
        %s154 = sand.u32 %s74, 1
        %s155 = scalar_lea.sflag [#allocation4], %s154
        %s156 = sand.u32 %s74, 1
        %s157 = smul.addr %s156, 8
        %s158 = scalar_lea.vmem [#allocation5], %s157
        %v159 = vld [vmem:[%s138] sm:$0xff]
        %v160 = vld [vmem:[%s1] sm:$0xff]
        %v161 = vmul.f32 %v159, 5.656854
        %v162 = vadd.f32 %v161, %v160
        %vm163 = vcmask 261120
        %164 = vst.msk [vmem:[%s158] sm:$0xff] %vm163, %v162
        %s165 = sand.u32 %s74, 1
        %s166 = scalar_lea.sflag [#allocation4], %s165
        %s167 = sand.u32 %s74, 1
        %s168 = smul.addr %s167, 8
        %s169 = scalar_lea.vmem [#allocation5], %s168
        // Predicated region
        $region33: #{tpu_custom_call.1} parent=27 // pred_check
          %p170 = pneg %p84
        $region34: #{tpu_custom_call.1} parent=27 // pred_check_branch
          %172 = sbr.rel (%p170) target = $region36
        $region35: #{tpu_custom_call.1} parent=27 // pred_region
          %s174 = ssub.s32 128, 128
          %175 = vsyncadd %s166, %s174
          %s176 = smul.addr %s19, 128
          %s177 = scalar_lea.hbm %s2, %s176
          %s179 = sshll.u32 %s169, 4
          %s180 = int_to_ptr.vmem [resolvable:$true] %s179
          %182 = dma.vmem_to_hbm [thread:$0]  %s180, 128, %s177, %s166
        $region36: #{tpu_custom_call.1} parent=27 // pred_fallthru
          _
      $region28: #{tpu_custom_call.1} parent=5 // pred_fallthru
        _
      %p183 = scmp.le.s32.totalorder 2, %s14
      // Predicated region
      $region37: #{tpu_custom_call.1} parent=5 // pred_check
        %p184 = pneg %p183
      $region38: #{tpu_custom_call.1} parent=5 // pred_check_branch
        %186 = sbr.rel (%p184) target = $region40
      $region39: #{tpu_custom_call.1} parent=5 // pred_region
        %s187 = ssub.s32 %s14, 2
        // Predicated region
        $region41: #{tpu_custom_call.1} parent=39 // pred_check
          %p188 = pneg %p90
        $region42: #{tpu_custom_call.1} parent=39 // pred_check_branch
          %190 = sbr.rel (%p188) target = $region44
        $region43: #{tpu_custom_call.1} parent=39 // pred_region
          %s191 = sand.u32 %s75, 1
          %s192 = scalar_lea.sflag [#allocation4], %s191
          %s193 = sand.u32 %s75, 1
          %s194 = smul.addr %s193, 8
          %s195 = scalar_lea.vmem [#allocation5], %s194
          %196 = dma.done %s192, 128
        $region44: #{tpu_custom_call.1} parent=39 // pred_fallthru
          _
      $region40: #{tpu_custom_call.1} parent=5 // pred_fallthru
        _
    $region6: #{tpu_custom_call.1} parent=1 // loop_footer
      %s18 = sadd.s32 1, %s14
    $region7: #{tpu_custom_call.1} parent=1 // loop_footer_branch
      %13 = sbr.rel target = $region3
    $region8: #{tpu_custom_call.1} parent=1 // loop_exit
      _
    %197 = vsyncpa [#allocation3], 1
    %s198 = scalar_lea.sflag [#allocation3], 1
    %199 = vsyncpa %s198, 1
    %200 = vsyncpa [#allocation4], 1
    %s201 = scalar_lea.sflag [#allocation4], 1
    %202 = vsyncpa %s201, 1

</llo_original>
